<compile_context>
chip_gen: v5e
topology: v5e:2x2
jax: 0.10.0
libtpu: 0.0.40
codegen_flags: <defaults>
</compile_context>

<pallas_src>
import functools

import jax
import jax.numpy as jnp
from jax.experimental import pallas as pl
from jax.experimental.pallas import tpu as pltpu

EPS = 1e-5
_VMEM_BUDGET = 48 * 1024 * 1024  # stays inside v7x's 64 MiB/TC with headroom


def _round_up(a, b):
    return ((a + b - 1) // b) * b


def _classifier_kernel(x_ref, w1a_ref, w1m_ref, b1_ref, w2_ref, b2_ref, o_ref,
                       *, C, HW):
    """pool(avg,max over HW) -> fc1(+folded BN0) -> ReLU -> fc2(+folded BN1)."""
    inv_hw = 1.0 / HW

    if len(x_ref.shape) == 3:
        # Fallback layout (large C): (block_n, C, HW); C fills sublanes.
        xv = x_ref[...]
        ap = jnp.sum(xv, axis=-1, dtype=jnp.float32) * inv_hw        # (bn, C) f32
        mp = jnp.max(xv, axis=-1).astype(jnp.float32)                # (bn, C) f32
    else:
        # Lane-dense layout (small C): (block_n, C*HW); pool each HW lane
        # segment separately (static slices, no full-tile f32 copy).
        ap_cols, mp_cols = [], []
        for c in range(C):
            seg = x_ref[:, c * HW:(c + 1) * HW]                      # (bn, HW)
            ap_cols.append(jnp.sum(seg, axis=-1, dtype=jnp.float32,
                                   keepdims=True))
            mp_cols.append(jnp.max(seg, axis=-1,
                                   keepdims=True).astype(jnp.float32))
        ap = jnp.concatenate(ap_cols, axis=-1) * inv_hw              # (bn, C)
        mp = jnp.concatenate(mp_cols, axis=-1)                       # (bn, C)

    # fc1 with BN0 folded; w1 pre-split into avg/max halves -> no concat needed.
    h = (jnp.dot(ap, w1a_ref[...], preferred_element_type=jnp.float32)
         + jnp.dot(mp, w1m_ref[...], preferred_element_type=jnp.float32)
         + b1_ref[...])
    h = jnp.maximum(h, 0.0)                                          # ReLU

    # fc2 with BN1 folded. (out_dim << 128 -> masked store, but output volume
    # is ~0.1% of the x stream, so intentionally not optimized further.)
    o_ref[...] = (jnp.dot(h, w2_ref[...], preferred_element_type=jnp.float32)
                  + b2_ref[...]).astype(o_ref.dtype)


def _vmem_bytes(block_n, C, HW, h1, out_dim, x_itemsize, use_2d):
    """Conservative VMEM footprint (sublane/lane padding, double buffers, temps)."""
    bn = _round_up(block_n, 16)                       # bf16-safe sublane padding
    if use_2d:
        x_tile = bn * _round_up(C * HW, 128) * x_itemsize
    else:
        x_tile = bn * _round_up(C, 16) * _round_up(HW, 128) * x_itemsize
    params = 2 * (2 * C * h1 + h1 + h1 * out_dim + out_dim) * 4
    out_tile = 2 * bn * _round_up(out_dim, 128) * 4
    temps = 4 * bn * (_round_up(2 * C, 128) + _round_up(h1, 128)) * 4
    return 2 * x_tile + params + out_tile + temps


def _choose_block_n(N, C, HW, h1, out_dim, x_itemsize, use_2d):
    if use_2d:
        row_bytes = _round_up(C * HW, 128) * x_itemsize
    else:
        row_bytes = _round_up(C, 16) * _round_up(HW, 128) * x_itemsize
    per_buf = 8 * 1024 * 1024                 # ~8 MiB per pipeline buffer (x2)
    bn = (per_buf // max(row_bytes, 1)) // 8 * 8
    bn = max(8, min(2048, bn))
    bn = min(bn, _round_up(N, 8))
    # Give both TensorCores work (v7x) when the batch allows >= 2 grid steps.
    if N > 8 and (N + bn - 1) // bn == 1:
        bn = max(8, _round_up((N + 1) // 2, 8))
    # Shrink if the (padded) footprint would exceed the VMEM budget.
    while bn > 8 and _vmem_bytes(bn, C, HW, h1, out_dim, x_itemsize,
                                 use_2d) > _VMEM_BUDGET:
        bn = max(8, (bn // 2) // 8 * 8)
    return bn


def classifier_forward(x, params, *, block_n=None):
    """x: (N, C, H, W); returns (N, out) float32 (eval-mode forward)."""
    N, C, H, W = x.shape
    HW = H * W
    inp = 2 * C

    w1, b1 = params["w1"], params["b1"]               # (h1, inp), (1, h1)
    w2, b2 = params["w2"], params["b2"]               # (out, h1), (1, out)
    h1 = w1.shape[0]
    out_dim = w2.shape[0]
    assert w1.shape[1] == inp, "fc1 in_features must equal 2*C"

    # ---- Fold eval-mode BN0 into fc1 and BN1 into fc2 (once, outside kernel).
    s0 = params["g0"] * jax.lax.rsqrt(params["v0"] + EPS)            # (1, inp)
    s1 = params["g1"] * jax.lax.rsqrt(params["v1"] + EPS)            # (1, h1)
    w1t = (w1.T * s0.reshape(inp, 1)).astype(jnp.float32)            # (inp, h1)
    b1f = (b1 + (params["be0"] - params["m0"] * s0) @ w1.T).astype(jnp.float32)
    w2t = (w2.T * s1.reshape(h1, 1)).astype(jnp.float32)             # (h1, out)
    b2f = (b2 + (params["be1"] - params["m1"] * s1) @ w2.T).astype(jnp.float32)
    w1a, w1m = w1t[:C], w1t[C:]          # avg-pool half / max-pool half of fc1

    # ---- Layout + tile selection (x streamed once, in its native dtype).
    use_2d = C <= 16                      # small C would be sublane-sparse in 3D
    itemsize = jnp.dtype(x.dtype).itemsize
    if block_n is None:
        block_n = _choose_block_n(N, C, HW, h1, out_dim, itemsize, use_2d)
    block_n = int(block_n)
    grid = ((N + block_n - 1) // block_n,)   # cdiv grid; tail tile is masked

    est = _vmem_bytes(block_n, C, HW, h1, out_dim, itemsize, use_2d)
    vmem_limit = int(min(_VMEM_BUDGET, max(est + (8 << 20), 32 << 20)))

    if use_2d:
        x_in = x.reshape(N, C * HW)      # contiguous reshape: no extra HBM pass
        x_spec = pl.BlockSpec((block_n, C * HW), lambda i: (i, 0))
    else:
        x_in = x.reshape(N, C, HW)
        x_spec = pl.BlockSpec((block_n, C, HW), lambda i: (i, 0, 0))

    kernel = functools.partial(_classifier_kernel, C=C, HW=HW)

    out = pl.pallas_call(
        kernel,
        out_shape=jax.ShapeDtypeStruct((N, out_dim), jnp.float32),
        grid=grid,
        in_specs=[
            x_spec,                                               # streamed, pipelined
            pl.BlockSpec((C, h1), lambda i: (0, 0)),              # resident params
            pl.BlockSpec((C, h1), lambda i: (0, 0)),
            pl.BlockSpec((1, h1), lambda i: (0, 0)),
            pl.BlockSpec((h1, out_dim), lambda i: (0, 0)),
            pl.BlockSpec((1, out_dim), lambda i: (0, 0)),
        ],
        out_specs=pl.BlockSpec((block_n, out_dim), lambda i: (i, 0)),
        compiler_params=pltpu.CompilerParams(
            dimension_semantics=("parallel",),   # shard batch tiles across TCs
            vmem_limit_bytes=vmem_limit,
        ),
    )(x_in, w1a, w1m, b1f, w2t, b2f)

    return out


def init_params(key, inp, h1, out):
    """PyTorch-style Linear init; non-trivial BN stats so the BN fold is exercised."""
    ks = jax.random.split(key, 12)
    bnd1 = 1.0 / (inp ** 0.5)
    bnd2 = 1.0 / (h1 ** 0.5)
    return {
        "w1": jax.random.uniform(ks[0], (h1, inp), jnp.float32, -bnd1, bnd1),
        "b1": jax.random.uniform(ks[1], (1, h1), jnp.float32, -bnd1, bnd1),
        "w2": jax.random.uniform(ks[2], (out, h1), jnp.float32, -bnd2, bnd2),
        "b2": jax.random.uniform(ks[3], (1, out), jnp.float32, -bnd2, bnd2),
        "g0": jax.random.uniform(ks[4], (1, inp), jnp.float32, 0.5, 1.5),
        "be0": 0.1 * jax.random.normal(ks[5], (1, inp), jnp.float32),
        "m0": 0.1 * jax.random.normal(ks[6], (1, inp), jnp.float32),
        "v0": jax.random.uniform(ks[7], (1, inp), jnp.float32, 0.5, 1.5),
        "g1": jax.random.uniform(ks[8], (1, h1), jnp.float32, 0.5, 1.5),
        "be1": 0.1 * jax.random.normal(ks[9], (1, h1), jnp.float32),
        "m1": 0.1 * jax.random.normal(ks[10], (1, h1), jnp.float32),
        "v1": jax.random.uniform(ks[11], (1, h1), jnp.float32, 0.5, 1.5),
    }


def reference_forward(x, p):
    """Pure-JAX f32 reference of the eval-mode PyTorch forward."""
    N, C, H, W = x.shape
    ap = x.reshape(N, C, -1).mean(-1)
    mp = x.reshape(N, C, -1).max(-1)
    feat = jnp.concatenate([ap, mp], axis=1)                         # (N, 2C)
    feat = (feat - p["m0"]) / jnp.sqrt(p["v0"] + EPS) * p["g0"] + p["be0"]
    h = jnp.maximum(feat @ p["w1"].T + p["b1"], 0.0)
    h = (h - p["m1"]) / jnp.sqrt(p["v1"] + EPS) * p["g1"] + p["be1"]
    return h @ p["w2"].T + p["b2"]


if __name__ == "__main__":
    jax.config.update("jax_default_matmul_precision", "highest")

    key = jax.random.PRNGKey(0)
    k1, k2, k3, k4 = jax.random.split(key, 4)

    # --- Test 1: small C -> lane-dense 2D layout + per-channel lane-segment pooling.
    N, C, H, W = 2, 4, 16, 16
    inp, h1, out_dim = 2 * C, 32, 2
    x = jax.random.normal(k1, (N, C, H, W), jnp.float32)
    params = init_params(k2, inp, h1, out_dim)

    y = jax.block_until_ready(classifier_forward(x, params))
    y_ref = reference_forward(x, params)
    assert y.shape == (N, out_dim)
    assert jnp.allclose(y, y_ref, atol=5e-3, rtol=5e-3), (y, y_ref)

    # --- Test 2: larger C -> fallback (block_n, C, HW) layout.
    N2, C2, H2, W2 = 4, 32, 8, 8
    x2 = jax.random.normal(k3, (N2, C2, H2, W2), jnp.float32)
    params2 = init_params(k4, 2 * C2, h1, out_dim)

    y2 = jax.block_until_ready(classifier_forward(x2, params2))
    y2_ref = reference_forward(x2, params2)
    assert y2.shape == (N2, out_dim)
    assert jnp.allclose(y2, y2_ref, atol=5e-3, rtol=5e-3), (y2, y2_ref)

    print("KERNEL_OK")
</pallas_src>

<mosaic_0001>
module attributes {stable_mosaic.version = 11 : i64} {
  func.func @_classifier_kernel(%arg0: i32, %arg1: memref<8x1024xf32, #tpu.memory_space<vmem>>, %arg2: memref<4x32xf32, #tpu.memory_space<vmem>>, %arg3: memref<4x32xf32, #tpu.memory_space<vmem>>, %arg4: memref<1x32xf32, #tpu.memory_space<vmem>>, %arg5: memref<32x2xf32, #tpu.memory_space<vmem>>, %arg6: memref<1x2xf32, #tpu.memory_space<vmem>>, %arg7: memref<8x2xf32, #tpu.memory_space<vmem>>) attributes {dimension_semantics = [#tpu.dimension_semantics<parallel>], iteration_bounds = array<i64: 1>, scalar_prefetch = 0 : i64, scratch_operands = 0 : i64, tpu.core_type = #tpu.core_type<tc>, window_params = [{transform_indices = @transform_0, window_bounds = array<i64: 8, 1024>}, {pipeline_mode = #tpu.pipeline_mode<synchronous>, transform_indices = @transform_1, window_bounds = array<i64: 4, 32>}, {pipeline_mode = #tpu.pipeline_mode<synchronous>, transform_indices = @transform_2, window_bounds = array<i64: 4, 32>}, {pipeline_mode = #tpu.pipeline_mode<synchronous>, transform_indices = @transform_3, window_bounds = array<i64: 1, 32>}, {pipeline_mode = #tpu.pipeline_mode<synchronous>, transform_indices = @transform_4, window_bounds = array<i64: 32, 2>}, {pipeline_mode = #tpu.pipeline_mode<synchronous>, transform_indices = @transform_5, window_bounds = array<i64: 1, 2>}, {transform_indices = @transform_6, window_bounds = array<i64: 8, 2>}]} {
    %c0 = arith.constant 0 : index
    %c0_0 = arith.constant 0 : index
    %0 = vector.load %arg1[%c0, %c0_0] : memref<8x1024xf32, #tpu.memory_space<vmem>>, vector<8x256xf32>
    %cst = arith.constant dense<0.000000e+00> : vector<8xf32>
    %1 = vector.multi_reduction <add>, %0, %cst [1] : vector<8x256xf32> to vector<8xf32>
    %2 = vector.shape_cast %1 : vector<8xf32> to vector<8x1xf32>
    %cst_1 = arith.constant dense<0xFF800000> : vector<8xf32>
    %3 = vector.multi_reduction <maximumf>, %0, %cst_1 [1] : vector<8x256xf32> to vector<8xf32>
    %4 = vector.shape_cast %3 : vector<8xf32> to vector<8x1xf32>
    %c0_2 = arith.constant 0 : index
    %c256 = arith.constant 256 : index
    %5 = vector.load %arg1[%c0_2, %c256] : memref<8x1024xf32, #tpu.memory_space<vmem>>, vector<8x256xf32>
    %cst_3 = arith.constant dense<0.000000e+00> : vector<8xf32>
    %6 = vector.multi_reduction <add>, %5, %cst_3 [1] : vector<8x256xf32> to vector<8xf32>
    %7 = vector.shape_cast %6 : vector<8xf32> to vector<8x1xf32>
    %cst_4 = arith.constant dense<0xFF800000> : vector<8xf32>
    %8 = vector.multi_reduction <maximumf>, %5, %cst_4 [1] : vector<8x256xf32> to vector<8xf32>
    %9 = vector.shape_cast %8 : vector<8xf32> to vector<8x1xf32>
    %c0_5 = arith.constant 0 : index
    %c512 = arith.constant 512 : index
    %10 = vector.load %arg1[%c0_5, %c512] : memref<8x1024xf32, #tpu.memory_space<vmem>>, vector<8x256xf32>
    %cst_6 = arith.constant dense<0.000000e+00> : vector<8xf32>
    %11 = vector.multi_reduction <add>, %10, %cst_6 [1] : vector<8x256xf32> to vector<8xf32>
    %12 = vector.shape_cast %11 : vector<8xf32> to vector<8x1xf32>
    %cst_7 = arith.constant dense<0xFF800000> : vector<8xf32>
    %13 = vector.multi_reduction <maximumf>, %10, %cst_7 [1] : vector<8x256xf32> to vector<8xf32>
    %14 = vector.shape_cast %13 : vector<8xf32> to vector<8x1xf32>
    %c0_8 = arith.constant 0 : index
    %c768 = arith.constant 768 : index
    %15 = vector.load %arg1[%c0_8, %c768] : memref<8x1024xf32, #tpu.memory_space<vmem>>, vector<8x256xf32>
    %cst_9 = arith.constant dense<0.000000e+00> : vector<8xf32>
    %16 = vector.multi_reduction <add>, %15, %cst_9 [1] : vector<8x256xf32> to vector<8xf32>
    %17 = vector.shape_cast %16 : vector<8xf32> to vector<8x1xf32>
    %cst_10 = arith.constant dense<0xFF800000> : vector<8xf32>
    %18 = vector.multi_reduction <maximumf>, %15, %cst_10 [1] : vector<8x256xf32> to vector<8xf32>
    %19 = vector.shape_cast %18 : vector<8xf32> to vector<8x1xf32>
    %20 = tpu.concatenate %2, %7, %12, %17 in 1 : vector<8x1xf32>, vector<8x1xf32>, vector<8x1xf32>, vector<8x1xf32> -> vector<8x4xf32>
    %cst_11 = arith.constant 3.906250e-03 : f32
    %21 = vector.broadcast %cst_11 : f32 to vector<8x4xf32>
    %22 = arith.mulf %20, %21 : vector<8x4xf32>
    %23 = tpu.concatenate %4, %9, %14, %19 in 1 : vector<8x1xf32>, vector<8x1xf32>, vector<8x1xf32>, vector<8x1xf32> -> vector<8x4xf32>
    %c0_12 = arith.constant 0 : index
    %c0_13 = arith.constant 0 : index
    %24 = vector.load %arg2[%c0_12, %c0_13] : memref<4x32xf32, #tpu.memory_space<vmem>>, vector<4x32xf32>
    %cst_14 = arith.constant dense<0.000000e+00> : vector<8x32xf32>
    %25 = tpu.matmul %22, %24, %cst_14 {dimension_numbers = #tpu.dot_dimension_numbers<[1], [0], [0], [1], [0, 0, 1, 1], [], []>, precision = #tpu.contract_precision<fp32>} : vector<8x4xf32>, vector<4x32xf32>, vector<8x32xf32> -> vector<8x32xf32>
    %c0_15 = arith.constant 0 : index
    %c0_16 = arith.constant 0 : index
    %26 = vector.load %arg3[%c0_15, %c0_16] : memref<4x32xf32, #tpu.memory_space<vmem>>, vector<4x32xf32>
    %cst_17 = arith.constant dense<0.000000e+00> : vector<8x32xf32>
    %27 = tpu.matmul %23, %26, %cst_17 {dimension_numbers = #tpu.dot_dimension_numbers<[1], [0], [0], [1], [0, 0, 1, 1], [], []>, precision = #tpu.contract_precision<fp32>} : vector<8x4xf32>, vector<4x32xf32>, vector<8x32xf32> -> vector<8x32xf32>
    %28 = arith.addf %25, %27 : vector<8x32xf32>
    %c0_18 = arith.constant 0 : index
    %c0_19 = arith.constant 0 : index
    %29 = vector.load %arg4[%c0_18, %c0_19] : memref<1x32xf32, #tpu.memory_space<vmem>>, vector<1x32xf32>
    %30 = vector.broadcast %29 : vector<1x32xf32> to vector<8x32xf32>
    %31 = arith.addf %28, %30 : vector<8x32xf32>
    %cst_20 = arith.constant 0.000000e+00 : f32
    %32 = vector.broadcast %cst_20 : f32 to vector<8x32xf32>
    %33 = arith.maximumf %31, %32 : vector<8x32xf32>
    %c0_21 = arith.constant 0 : index
    %c0_22 = arith.constant 0 : index
    %34 = vector.load %arg5[%c0_21, %c0_22] : memref<32x2xf32, #tpu.memory_space<vmem>>, vector<32x2xf32>
    %cst_23 = arith.constant dense<0.000000e+00> : vector<8x2xf32>
    %35 = tpu.matmul %33, %34, %cst_23 {dimension_numbers = #tpu.dot_dimension_numbers<[1], [0], [0], [1], [0, 0, 1, 1], [], []>, precision = #tpu.contract_precision<fp32>} : vector<8x32xf32>, vector<32x2xf32>, vector<8x2xf32> -> vector<8x2xf32>
    %c0_24 = arith.constant 0 : index
    %c0_25 = arith.constant 0 : index
    %36 = vector.load %arg6[%c0_24, %c0_25] : memref<1x2xf32, #tpu.memory_space<vmem>>, vector<1x2xf32>
    %37 = vector.broadcast %36 : vector<1x2xf32> to vector<8x2xf32>
    %38 = arith.addf %35, %37 : vector<8x2xf32>
    %c0_26 = arith.constant 0 : index
    %c0_27 = arith.constant 0 : index
    %39 = vector.load %arg7[%c0_26, %c0_27] : memref<8x2xf32, #tpu.memory_space<vmem>>, vector<8x2xf32>
    tpu.vector_store %arg7[%c0_26, %c0_27], %38 {strides = array<i32>} : memref<8x2xf32, #tpu.memory_space<vmem>>, vector<8x2xf32>,
    return
  }
  func.func @transform_0(%arg0: i32) -> (i32, i32) {
    %c0_i32 = arith.constant 0 : i32
    %c0_i32_0 = arith.constant 0 : i32
    return %arg0, %c0_i32 : i32, i32
  }
  func.func @transform_1(%arg0: i32) -> (i32, i32) {
    %c0_i32 = arith.constant 0 : i32
    %c0_i32_0 = arith.constant 0 : i32
    %c0_i32_1 = arith.constant 0 : i32
    return %c0_i32, %c0_i32_0 : i32, i32
  }
  func.func @transform_2(%arg0: i32) -> (i32, i32) {
    %c0_i32 = arith.constant 0 : i32
    %c0_i32_0 = arith.constant 0 : i32
    %c0_i32_1 = arith.constant 0 : i32
    return %c0_i32, %c0_i32_0 : i32, i32
  }
  func.func @transform_3(%arg0: i32) -> (i32, i32) {
    %c0_i32 = arith.constant 0 : i32
    %c0_i32_0 = arith.constant 0 : i32
    %c0_i32_1 = arith.constant 0 : i32
    return %c0_i32, %c0_i32_0 : i32, i32
  }
  func.func @transform_4(%arg0: i32) -> (i32, i32) {
    %c0_i32 = arith.constant 0 : i32
    %c0_i32_0 = arith.constant 0 : i32
    %c0_i32_1 = arith.constant 0 : i32
    return %c0_i32, %c0_i32_0 : i32, i32
  }
  func.func @transform_5(%arg0: i32) -> (i32, i32) {
    %c0_i32 = arith.constant 0 : i32
    %c0_i32_0 = arith.constant 0 : i32
    %c0_i32_1 = arith.constant 0 : i32
    return %c0_i32, %c0_i32_0 : i32, i32
  }
  func.func @transform_6(%arg0: i32) -> (i32, i32) {
    %c0_i32 = arith.constant 0 : i32
    %c0_i32_0 = arith.constant 0 : i32
    return %arg0, %c0_i32 : i32, i32
  }
}

</mosaic_0001>

<llo_original>
// kernel: tpu_custom_call.1
$region0: #{tpu_custom_call.1}
  #allocation0 [shape = 'u32[]', space=smem, size = 0x4, offset = 0x4, fixed_abs, tag = 'smem constant byte address 0x4 - core index']
  #allocation1 [shape = 'u32[72,128]{1,0:T(1,128)}', space=vmem, size = 0x9000, scoped, tag = 'internal scratch']
  %s0 = inlined_call_operand.vmem [shape: f32[2,1024], index: 0, kind: input, shape index: {}]
  %s1 = inlined_call_operand.vmem [shape: f32[4,32], index: 1, kind: input, shape index: {}]
  %s2 = inlined_call_operand.vmem [shape: f32[4,32], index: 2, kind: input, shape index: {}]
  %s3 = inlined_call_operand.vmem [shape: f32[1,32], index: 3, kind: input, shape index: {}]
  %s4 = inlined_call_operand.vmem [shape: f32[32,2], index: 4, kind: input, shape index: {}]
  %s5 = inlined_call_operand.vmem [shape: f32[1,2], index: 5, kind: input, shape index: {}]
  %s6 = inlined_call_operand.hbm [shape: f32[2,2], index: 6, kind: output, shape index: {}]
  %s7 = sld [smem:[#allocation0]]
  $region34: #{tpu_custom_call.1} parent=0
    _
  %s9 = ssub.s32 1, %s7
  %s10 = scalar_select 0, %s9, %s7
  $region1: #{tpu_custom_call.1} parent=0
    #allocation2 [shape = 'u8[4096]{0}', space=vmem, size = 0x1000, scoped, tag = 'output window, operand 0, single buffered']
    #allocation3 [shape = 's32[1]{0}', space=sflag, size = 0x4, scoped, tag = 'scoped memory for tpu_custom_call.1']
    %11 = vsyncpa [#allocation3], 0
    // Predicated region
    $region2: #{tpu_custom_call.1} parent=1 // pred_check
      _
    $region3: #{tpu_custom_call.1} parent=1 // pred_check_branch
      %13 = sbr.rel (0) target = $region5
    $region4: #{tpu_custom_call.1} parent=1 // pred_region
      _
    $region5: #{tpu_custom_call.1} parent=1 // pred_fallthru
      _
    // Predicated region
    $region6: #{tpu_custom_call.1} parent=1 // pred_check
      _
    $region7: #{tpu_custom_call.1} parent=1 // pred_check_branch
      %15 = sbr.rel (0) target = $region9
    $region8: #{tpu_custom_call.1} parent=1 // pred_region
      _
    $region9: #{tpu_custom_call.1} parent=1 // pred_fallthru
      _
    // Predicated region
    $region10: #{tpu_custom_call.1} parent=1 // pred_check
      _
    $region11: #{tpu_custom_call.1} parent=1 // pred_check_branch
      %17 = sbr.rel (0) target = $region13
    $region12: #{tpu_custom_call.1} parent=1 // pred_region
      _
    $region13: #{tpu_custom_call.1} parent=1 // pred_fallthru
      _
    // Predicated region
    $region14: #{tpu_custom_call.1} parent=1 // pred_check
      _
    $region15: #{tpu_custom_call.1} parent=1 // pred_check_branch
      %19 = sbr.rel (0) target = $region17
    $region16: #{tpu_custom_call.1} parent=1 // pred_region
      _
    $region17: #{tpu_custom_call.1} parent=1 // pred_fallthru
      _
    // Predicated region
    $region18: #{tpu_custom_call.1} parent=1 // pred_check
      _
    $region19: #{tpu_custom_call.1} parent=1 // pred_check_branch
      %21 = sbr.rel (0) target = $region21
    $region20: #{tpu_custom_call.1} parent=1 // pred_region
      _
    $region21: #{tpu_custom_call.1} parent=1 // pred_fallthru
      _
    // Predicated region
    $region22: #{tpu_custom_call.1} parent=1 // pred_check
      _
    $region23: #{tpu_custom_call.1} parent=1 // pred_check_branch
      %23 = sbr.rel (0) target = $region25
    $region24: #{tpu_custom_call.1} parent=1 // pred_region
      _
    $region25: #{tpu_custom_call.1} parent=1 // pred_fallthru
      _
    %v24 = vld [vmem:[%s0] sm:$0xf]
    %v25 = vld [vmem:[%s0 + $0x10] sm:$0xf]
    %v26 = vld [vmem:[%s0 + $0x20] sm:$0xf]
    %v27 = vld [vmem:[%s0 + $0x30] sm:$0xf]
    %32 = vst [vmem:[#allocation1] ss:$4 sm:$0xff] %v24
    %s33 = scalar_lea.vmem [#allocation1], 1
    %34 = vst [vmem:[%s33] ss:$4 sm:$0xff] %v25
    %s35 = scalar_lea.vmem [#allocation1], 2
    %36 = vst [vmem:[%s35] ss:$4 sm:$0xff] %v26
    %s37 = scalar_lea.vmem [#allocation1], 3
    %38 = vst [vmem:[%s37] ss:$4 sm:$0xff] %v27
    %v39 = vld.sshfl [vmem:[#allocation1] sm:$0xff pattern:$0x73625140]
    %v40 = vld.sshfl [vmem:[#allocation1 + $0x8] sm:$0xff pattern:$0x73625140]
    %v43 = vadd.f32 %v39, %v40
    %44 = vadd.xlane.f32.xlu0 %v43
    %v45 = vpop.xlane.xlu0 %44
    %46 = vst [vmem:[#allocation1] ss:$4 sm:$0xff] %v24
    %s47 = scalar_lea.vmem [#allocation1], 1
    %48 = vst [vmem:[%s47] ss:$4 sm:$0xff] %v25
    %s49 = scalar_lea.vmem [#allocation1], 2
    %50 = vst [vmem:[%s49] ss:$4 sm:$0xff] %v26
    %s51 = scalar_lea.vmem [#allocation1], 3
    %52 = vst [vmem:[%s51] ss:$4 sm:$0xff] %v27
    %v53 = vld.sshfl [vmem:[#allocation1] sm:$0xff pattern:$0x73625140]
    %v54 = vld.sshfl [vmem:[#allocation1 + $0x8] sm:$0xff pattern:$0x73625140]
    %v57 = vmax.f32 %v53, %v54
    %58 = vmax.xlane.f32.xlu0 %v57
    %v59 = vpop.xlane.xlu0 %58
    %v60 = vld [vmem:[%s0 + $0x4] sm:$0xf]
    %v61 = vld [vmem:[%s0 + $0x14] sm:$0xf]
    %v62 = vld [vmem:[%s0 + $0x24] sm:$0xf]
    %v63 = vld [vmem:[%s0 + $0x34] sm:$0xf]
    %68 = vst [vmem:[#allocation1] ss:$4 sm:$0xff] %v60
    %s69 = scalar_lea.vmem [#allocation1], 1
    %70 = vst [vmem:[%s69] ss:$4 sm:$0xff] %v61
    %s71 = scalar_lea.vmem [#allocation1], 2
    %72 = vst [vmem:[%s71] ss:$4 sm:$0xff] %v62
    %s73 = scalar_lea.vmem [#allocation1], 3
    %74 = vst [vmem:[%s73] ss:$4 sm:$0xff] %v63
    %v75 = vld.sshfl [vmem:[#allocation1] sm:$0xff pattern:$0x73625140]
    %v76 = vld.sshfl [vmem:[#allocation1 + $0x8] sm:$0xff pattern:$0x73625140]
    %v79 = vadd.f32 %v75, %v76
    %80 = vadd.xlane.f32.xlu0 %v79
    %v81 = vpop.xlane.xlu0 %80
    %82 = vst [vmem:[#allocation1] ss:$4 sm:$0xff] %v60
    %s83 = scalar_lea.vmem [#allocation1], 1
    %84 = vst [vmem:[%s83] ss:$4 sm:$0xff] %v61
    %s85 = scalar_lea.vmem [#allocation1], 2
    %86 = vst [vmem:[%s85] ss:$4 sm:$0xff] %v62
    %s87 = scalar_lea.vmem [#allocation1], 3
    %88 = vst [vmem:[%s87] ss:$4 sm:$0xff] %v63
    %v89 = vld.sshfl [vmem:[#allocation1] sm:$0xff pattern:$0x73625140]
    %v90 = vld.sshfl [vmem:[#allocation1 + $0x8] sm:$0xff pattern:$0x73625140]
    %v93 = vmax.f32 %v89, %v90
    %94 = vmax.xlane.f32.xlu0 %v93
    %v95 = vpop.xlane.xlu0 %94
    %v96 = vld [vmem:[%s0 + $0x8] sm:$0xf]
    %v97 = vld [vmem:[%s0 + $0x18] sm:$0xf]
    %v98 = vld [vmem:[%s0 + $0x28] sm:$0xf]
    %v99 = vld [vmem:[%s0 + $0x38] sm:$0xf]
    %104 = vst [vmem:[#allocation1] ss:$4 sm:$0xff] %v96
    %s105 = scalar_lea.vmem [#allocation1], 1
    %106 = vst [vmem:[%s105] ss:$4 sm:$0xff] %v97
    %s107 = scalar_lea.vmem [#allocation1], 2
    %108 = vst [vmem:[%s107] ss:$4 sm:$0xff] %v98
    %s109 = scalar_lea.vmem [#allocation1], 3
    %110 = vst [vmem:[%s109] ss:$4 sm:$0xff] %v99
    %v111 = vld.sshfl [vmem:[#allocation1] sm:$0xff pattern:$0x73625140]
    %v112 = vld.sshfl [vmem:[#allocation1 + $0x8] sm:$0xff pattern:$0x73625140]
    %v115 = vadd.f32 %v111, %v112
    %116 = vadd.xlane.f32.xlu0 %v115
    %v117 = vpop.xlane.xlu0 %116
    %118 = vst [vmem:[#allocation1] ss:$4 sm:$0xff] %v96
    %s119 = scalar_lea.vmem [#allocation1], 1
    %120 = vst [vmem:[%s119] ss:$4 sm:$0xff] %v97
    %s121 = scalar_lea.vmem [#allocation1], 2
    %122 = vst [vmem:[%s121] ss:$4 sm:$0xff] %v98
    %s123 = scalar_lea.vmem [#allocation1], 3
    %124 = vst [vmem:[%s123] ss:$4 sm:$0xff] %v99
    %v125 = vld.sshfl [vmem:[#allocation1] sm:$0xff pattern:$0x73625140]
    %v126 = vld.sshfl [vmem:[#allocation1 + $0x8] sm:$0xff pattern:$0x73625140]
    %v129 = vmax.f32 %v125, %v126
    %130 = vmax.xlane.f32.xlu0 %v129
    %v131 = vpop.xlane.xlu0 %130
    %v132 = vld [vmem:[%s0 + $0xc] sm:$0xf]
    %v133 = vld [vmem:[%s0 + $0x1c] sm:$0xf]
    %v134 = vld [vmem:[%s0 + $0x2c] sm:$0xf]
    %v135 = vld [vmem:[%s0 + $0x3c] sm:$0xf]
    %140 = vst [vmem:[#allocation1] ss:$4 sm:$0xff] %v132
    %s141 = scalar_lea.vmem [#allocation1], 1
    %142 = vst [vmem:[%s141] ss:$4 sm:$0xff] %v133
    %s143 = scalar_lea.vmem [#allocation1], 2
    %144 = vst [vmem:[%s143] ss:$4 sm:$0xff] %v134
    %s145 = scalar_lea.vmem [#allocation1], 3
    %146 = vst [vmem:[%s145] ss:$4 sm:$0xff] %v135
    %v147 = vld.sshfl [vmem:[#allocation1] sm:$0xff pattern:$0x73625140]
    %v148 = vld.sshfl [vmem:[#allocation1 + $0x8] sm:$0xff pattern:$0x73625140]
    %v151 = vadd.f32 %v147, %v148
    %152 = vadd.xlane.f32.xlu0 %v151
    %v153 = vpop.xlane.xlu0 %152
    %154 = vst [vmem:[#allocation1] ss:$4 sm:$0xff] %v132
    %s155 = scalar_lea.vmem [#allocation1], 1
    %156 = vst [vmem:[%s155] ss:$4 sm:$0xff] %v133
    %s157 = scalar_lea.vmem [#allocation1], 2
    %158 = vst [vmem:[%s157] ss:$4 sm:$0xff] %v134
    %s159 = scalar_lea.vmem [#allocation1], 3
    %160 = vst [vmem:[%s159] ss:$4 sm:$0xff] %v135
    %v161 = vld.sshfl [vmem:[#allocation1] sm:$0xff pattern:$0x73625140]
    %v162 = vld.sshfl [vmem:[#allocation1 + $0x8] sm:$0xff pattern:$0x73625140]
    %v165 = vmax.f32 %v161, %v162
    %166 = vmax.xlane.f32.xlu0 %v165
    %v167 = vpop.xlane.xlu0 %166
    %vm168 = vcmask 7168
    %v169 = vsel %vm168, %v45, %v81
    %vm170 = vcmask 15360
    %v171 = vsel %vm170, %v169, %v117
    %vm172 = vcmask 23552
    %v173 = vsel %vm172, %v171, %v153
    %v174 = vmul.f32 %v173, 0.00390625
    %v175 = vsel %vm168, %v59, %v95
    %v176 = vsel %vm170, %v175, %v131
    %v177 = vsel %vm172, %v176, %v167
    %v178 = vld [vmem:[%s1] sm:$0xf]
    %v179 = vld [vmem:[%s2] sm:$0xf]
    %vm180 = vcmask 31744
    %v182 = vsel %vm180, %v177, 0
    %vm184 = vcmask 1043456
    %v186 = vsel %vm184, %v179, 0
    %188 = vmatpush.msra.mxu0 0.0
    %189 = vmatpush.msra.mxu0 0.0
    %190 = vmatpush.msra.mxu0 0.0
    %191 = vmatpush.msra.mxu0 0.0
    %192 = vmatpush.msra.mxu0 0.0
    %193 = vmatpush.msra.mxu0 0.0
    %194 = vmatpush.msra.mxu0 0.0
    %195 = vmatpush.msra.mxu0 0.0
    %196 = vmatpush.msra.mxu0 0.0
    %197 = vmatpush.msra.mxu0 0.0
    %198 = vmatpush.msra.mxu0 0.0
    %199 = vmatpush.msra.mxu0 0.0
    %200 = vmatpush.msra.mxu0 0.0
    %201 = vmatpush.msra.mxu0 0.0
    %202 = vmatpush.msra.mxu0 0.0
    %v203 = vand.u32 %v186, 4294901760
    %204 = vmatpush.msra.mxu0 %v203
    %v205 = vand.u32 %v182, 4294901760
    %v206 = vsub.f32 %v182, %v205
    %v207 = vand.u32 %v206, 4294901760
    %v208 = vsub.f32 %v206, %v207
    %v209 = vand.u32 %v208, 4294901760
    %210 = vmatmul.f32.gmra.mxu0 %v209
    %v211 = vpop.f32.mrf.mxu0
    %v212 = vadd.f32 0.0, %v211
    %213 = vdwg.mxu0
    %214 = vmatpush.msra.mxu0 0.0
    %215 = vmatpush.msra.mxu0 0.0
    %216 = vmatpush.msra.mxu0 0.0
    %217 = vmatpush.msra.mxu0 0.0
    %218 = vmatpush.msra.mxu0 0.0
    %219 = vmatpush.msra.mxu0 0.0
    %220 = vmatpush.msra.mxu0 0.0
    %221 = vmatpush.msra.mxu0 0.0
    %222 = vmatpush.msra.mxu0 0.0
    %223 = vmatpush.msra.mxu0 0.0
    %224 = vmatpush.msra.mxu0 0.0
    %225 = vmatpush.msra.mxu0 0.0
    %226 = vmatpush.msra.mxu0 0.0
    %227 = vmatpush.msra.mxu0 0.0
    %228 = vmatpush.msra.mxu0 0.0
    %v229 = vand.u32 %v186, 4294901760
    %v230 = vsub.f32 %v186, %v229
    %v231 = vand.u32 %v230, 4294901760
    %v232 = vsub.f32 %v230, %v231
    %v233 = vand.u32 %v232, 4294901760
    %234 = vmatpush.msra.mxu0 %v233
    %v235 = vand.u32 %v182, 4294901760
    %236 = vmatmul.f32.gmra.mxu0 %v235
    %v237 = vpop.f32.mrf.mxu0
    %v238 = vadd.f32 %v212, %v237
    %239 = vdwg.mxu0
    %240 = vmatpush.msra.mxu0 0.0
    %241 = vmatpush.msra.mxu0 0.0
    %242 = vmatpush.msra.mxu0 0.0
    %243 = vmatpush.msra.mxu0 0.0
    %244 = vmatpush.msra.mxu0 0.0
    %245 = vmatpush.msra.mxu0 0.0
    %246 = vmatpush.msra.mxu0 0.0
    %247 = vmatpush.msra.mxu0 0.0
    %248 = vmatpush.msra.mxu0 0.0
    %249 = vmatpush.msra.mxu0 0.0
    %250 = vmatpush.msra.mxu0 0.0
    %251 = vmatpush.msra.mxu0 0.0
    %252 = vmatpush.msra.mxu0 0.0
    %253 = vmatpush.msra.mxu0 0.0
    %254 = vmatpush.msra.mxu0 0.0
    %v255 = vand.u32 %v186, 4294901760
    %v256 = vsub.f32 %v186, %v255
    %257 = vmatpush.msra.mxu0 %v256
    %v258 = vand.u32 %v182, 4294901760
    %v259 = vsub.f32 %v182, %v258
    %260 = vmatmul.f32.gmra.mxu0 %v259
    %v261 = vpop.f32.mrf.mxu0
    %v262 = vadd.f32 %v238, %v261
    %263 = vdwg.mxu0
    %264 = vmatpush.msra.mxu0 0.0
    %265 = vmatpush.msra.mxu0 0.0
    %266 = vmatpush.msra.mxu0 0.0
    %267 = vmatpush.msra.mxu0 0.0
    %268 = vmatpush.msra.mxu0 0.0
    %269 = vmatpush.msra.mxu0 0.0
    %270 = vmatpush.msra.mxu0 0.0
    %271 = vmatpush.msra.mxu0 0.0
    %272 = vmatpush.msra.mxu0 0.0
    %273 = vmatpush.msra.mxu0 0.0
    %274 = vmatpush.msra.mxu0 0.0
    %275 = vmatpush.msra.mxu0 0.0
    %276 = vmatpush.msra.mxu0 0.0
    %277 = vmatpush.msra.mxu0 0.0
    %278 = vmatpush.msra.mxu0 0.0
    %v279 = vand.u32 %v186, 4294901760
    %280 = vmatpush.msra.mxu0 %v279
    %v281 = vand.u32 %v182, 4294901760
    %v282 = vsub.f32 %v182, %v281
    %v283 = vand.u32 %v282, 4294901760
    %284 = vmatmul.f32.gmra.mxu0 %v283
    %v285 = vpop.f32.mrf.mxu0
    %v286 = vadd.f32 %v262, %v285
    %287 = vdwg.mxu0
    %288 = vmatpush.msra.mxu0 0.0
    %289 = vmatpush.msra.mxu0 0.0
    %290 = vmatpush.msra.mxu0 0.0
    %291 = vmatpush.msra.mxu0 0.0
    %292 = vmatpush.msra.mxu0 0.0
    %293 = vmatpush.msra.mxu0 0.0
    %294 = vmatpush.msra.mxu0 0.0
    %295 = vmatpush.msra.mxu0 0.0
    %296 = vmatpush.msra.mxu0 0.0
    %297 = vmatpush.msra.mxu0 0.0
    %298 = vmatpush.msra.mxu0 0.0
    %299 = vmatpush.msra.mxu0 0.0
    %300 = vmatpush.msra.mxu0 0.0
    %301 = vmatpush.msra.mxu0 0.0
    %302 = vmatpush.msra.mxu0 0.0
    %v303 = vand.u32 %v186, 4294901760
    %v304 = vsub.f32 %v186, %v303
    %v305 = vand.u32 %v304, 4294901760
    %306 = vmatpush.msra.mxu0 %v305
    %v307 = vand.u32 %v182, 4294901760
    %308 = vmatmul.f32.gmra.mxu0 %v307
    %v309 = vpop.f32.mrf.mxu0
    %v310 = vadd.f32 %v286, %v309
    %311 = vdwg.mxu0
    %312 = vmatpush.msra.mxu0 0.0
    %313 = vmatpush.msra.mxu0 0.0
    %314 = vmatpush.msra.mxu0 0.0
    %315 = vmatpush.msra.mxu0 0.0
    %316 = vmatpush.msra.mxu0 0.0
    %317 = vmatpush.msra.mxu0 0.0
    %318 = vmatpush.msra.mxu0 0.0
    %319 = vmatpush.msra.mxu0 0.0
    %320 = vmatpush.msra.mxu0 0.0
    %321 = vmatpush.msra.mxu0 0.0
    %322 = vmatpush.msra.mxu0 0.0
    %323 = vmatpush.msra.mxu0 0.0
    %324 = vmatpush.msra.mxu0 0.0
    %325 = vmatpush.msra.mxu0 0.0
    %326 = vmatpush.msra.mxu0 0.0
    %v327 = vand.u32 %v186, 4294901760
    %328 = vmatpush.msra.mxu0 %v327
    %v329 = vand.u32 %v182, 4294901760
    %330 = vmatmul.f32.gmra.mxu0 %v329
    %v331 = vpop.f32.mrf.mxu0
    %v332 = vadd.f32 %v310, %v331
    %333 = vdwg.mxu0
    %v335 = vsel %vm180, %v174, 0
    %v338 = vsel %vm184, %v178, 0
    %340 = vmatpush.msra.mxu0 0.0
    %341 = vmatpush.msra.mxu0 0.0
    %342 = vmatpush.msra.mxu0 0.0
    %343 = vmatpush.msra.mxu0 0.0
    %344 = vmatpush.msra.mxu0 0.0
    %345 = vmatpush.msra.mxu0 0.0
    %346 = vmatpush.msra.mxu0 0.0
    %347 = vmatpush.msra.mxu0 0.0
    %348 = vmatpush.msra.mxu0 0.0
    %349 = vmatpush.msra.mxu0 0.0
    %350 = vmatpush.msra.mxu0 0.0
    %351 = vmatpush.msra.mxu0 0.0
    %352 = vmatpush.msra.mxu0 0.0
    %353 = vmatpush.msra.mxu0 0.0
    %354 = vmatpush.msra.mxu0 0.0
    %v355 = vand.u32 %v338, 4294901760
    %356 = vmatpush.msra.mxu0 %v355
    %v357 = vand.u32 %v335, 4294901760
    %v358 = vsub.f32 %v335, %v357
    %v359 = vand.u32 %v358, 4294901760
    %v360 = vsub.f32 %v358, %v359
    %v361 = vand.u32 %v360, 4294901760
    %362 = vmatmul.f32.gmra.mxu0 %v361
    %v363 = vpop.f32.mrf.mxu0
    %v364 = vadd.f32 %v332, %v363
    %365 = vdwg.mxu0
    %366 = vmatpush.msra.mxu0 0.0
    %367 = vmatpush.msra.mxu0 0.0
    %368 = vmatpush.msra.mxu0 0.0
    %369 = vmatpush.msra.mxu0 0.0
    %370 = vmatpush.msra.mxu0 0.0
    %371 = vmatpush.msra.mxu0 0.0
    %372 = vmatpush.msra.mxu0 0.0
    %373 = vmatpush.msra.mxu0 0.0
    %374 = vmatpush.msra.mxu0 0.0
    %375 = vmatpush.msra.mxu0 0.0
    %376 = vmatpush.msra.mxu0 0.0
    %377 = vmatpush.msra.mxu0 0.0
    %378 = vmatpush.msra.mxu0 0.0
    %379 = vmatpush.msra.mxu0 0.0
    %380 = vmatpush.msra.mxu0 0.0
    %v381 = vand.u32 %v338, 4294901760
    %v382 = vsub.f32 %v338, %v381
    %v383 = vand.u32 %v382, 4294901760
    %v384 = vsub.f32 %v382, %v383
    %v385 = vand.u32 %v384, 4294901760
    %386 = vmatpush.msra.mxu0 %v385
    %v387 = vand.u32 %v335, 4294901760
    %388 = vmatmul.f32.gmra.mxu0 %v387
    %v389 = vpop.f32.mrf.mxu0
    %v390 = vadd.f32 %v364, %v389
    %391 = vdwg.mxu0
    %392 = vmatpush.msra.mxu0 0.0
    %393 = vmatpush.msra.mxu0 0.0
    %394 = vmatpush.msra.mxu0 0.0
    %395 = vmatpush.msra.mxu0 0.0
    %396 = vmatpush.msra.mxu0 0.0
    %397 = vmatpush.msra.mxu0 0.0
    %398 = vmatpush.msra.mxu0 0.0
    %399 = vmatpush.msra.mxu0 0.0
    %400 = vmatpush.msra.mxu0 0.0
    %401 = vmatpush.msra.mxu0 0.0
    %402 = vmatpush.msra.mxu0 0.0
    %403 = vmatpush.msra.mxu0 0.0
    %404 = vmatpush.msra.mxu0 0.0
    %405 = vmatpush.msra.mxu0 0.0
    %406 = vmatpush.msra.mxu0 0.0
    %v407 = vand.u32 %v338, 4294901760
    %v408 = vsub.f32 %v338, %v407
    %409 = vmatpush.msra.mxu0 %v408
    %v410 = vand.u32 %v335, 4294901760
    %v411 = vsub.f32 %v335, %v410
    %412 = vmatmul.f32.gmra.mxu0 %v411
    %v413 = vpop.f32.mrf.mxu0
    %v414 = vadd.f32 %v390, %v413
    %415 = vdwg.mxu0
    %416 = vmatpush.msra.mxu0 0.0
    %417 = vmatpush.msra.mxu0 0.0
    %418 = vmatpush.msra.mxu0 0.0
    %419 = vmatpush.msra.mxu0 0.0
    %420 = vmatpush.msra.mxu0 0.0
    %421 = vmatpush.msra.mxu0 0.0
    %422 = vmatpush.msra.mxu0 0.0
    %423 = vmatpush.msra.mxu0 0.0
    %424 = vmatpush.msra.mxu0 0.0
    %425 = vmatpush.msra.mxu0 0.0
    %426 = vmatpush.msra.mxu0 0.0
    %427 = vmatpush.msra.mxu0 0.0
    %428 = vmatpush.msra.mxu0 0.0
    %429 = vmatpush.msra.mxu0 0.0
    %430 = vmatpush.msra.mxu0 0.0
    %v431 = vand.u32 %v338, 4294901760
    %432 = vmatpush.msra.mxu0 %v431
    %v433 = vand.u32 %v335, 4294901760
    %v434 = vsub.f32 %v335, %v433
    %v435 = vand.u32 %v434, 4294901760
    %436 = vmatmul.f32.gmra.mxu0 %v435
    %v437 = vpop.f32.mrf.mxu0
    %v438 = vadd.f32 %v414, %v437
    %439 = vdwg.mxu0
    %440 = vmatpush.msra.mxu0 0.0
    %441 = vmatpush.msra.mxu0 0.0
    %442 = vmatpush.msra.mxu0 0.0
    %443 = vmatpush.msra.mxu0 0.0
    %444 = vmatpush.msra.mxu0 0.0
    %445 = vmatpush.msra.mxu0 0.0
    %446 = vmatpush.msra.mxu0 0.0
    %447 = vmatpush.msra.mxu0 0.0
    %448 = vmatpush.msra.mxu0 0.0
    %449 = vmatpush.msra.mxu0 0.0
    %450 = vmatpush.msra.mxu0 0.0
    %451 = vmatpush.msra.mxu0 0.0
    %452 = vmatpush.msra.mxu0 0.0
    %453 = vmatpush.msra.mxu0 0.0
    %454 = vmatpush.msra.mxu0 0.0
    %v455 = vand.u32 %v338, 4294901760
    %v456 = vsub.f32 %v338, %v455
    %v457 = vand.u32 %v456, 4294901760
    %458 = vmatpush.msra.mxu0 %v457
    %v459 = vand.u32 %v335, 4294901760
    %460 = vmatmul.f32.gmra.mxu0 %v459
    %v461 = vpop.f32.mrf.mxu0
    %v462 = vadd.f32 %v438, %v461
    %463 = vdwg.mxu0
    %464 = vmatpush.msra.mxu0 0.0
    %465 = vmatpush.msra.mxu0 0.0
    %466 = vmatpush.msra.mxu0 0.0
    %467 = vmatpush.msra.mxu0 0.0
    %468 = vmatpush.msra.mxu0 0.0
    %469 = vmatpush.msra.mxu0 0.0
    %470 = vmatpush.msra.mxu0 0.0
    %471 = vmatpush.msra.mxu0 0.0
    %472 = vmatpush.msra.mxu0 0.0
    %473 = vmatpush.msra.mxu0 0.0
    %474 = vmatpush.msra.mxu0 0.0
    %475 = vmatpush.msra.mxu0 0.0
    %476 = vmatpush.msra.mxu0 0.0
    %477 = vmatpush.msra.mxu0 0.0
    %478 = vmatpush.msra.mxu0 0.0
    %v479 = vand.u32 %v338, 4294901760
    %480 = vmatpush.msra.mxu0 %v479
    %v481 = vand.u32 %v335, 4294901760
    %482 = vmatmul.f32.gmra.mxu0 %v481
    %v483 = vpop.f32.mrf.mxu0
    %v484 = vadd.f32 %v462, %v483
    %485 = vdwg.mxu0
    %v486 = vld [vmem:[%s3] sm:$0x1]
    %v488 = vperm.slane %v486, 0
    %v490 = vadd.f32 %v484, %v488
    %v491 = vmax.f32 %v490, 0.0
    %v492 = vld [vmem:[%s4] sm:$0xff]
    %v493 = vld [vmem:[%s4 + $0x8] sm:$0xff]
    %v494 = vld [vmem:[%s4 + $0x10] sm:$0xff]
    %v495 = vld [vmem:[%s4 + $0x18] sm:$0xff]
    %v496 = vld [vmem:[%s5] sm:$0x1]
    %v498 = vperm.slane %v496, 0
    %vm500 = vcmask 261120
    %v502 = vsel %vm500, %v491, 0
    %504 = vmatpush.msra.mxu0 0.0
    %505 = vmatpush.msra.mxu0 0.0
    %506 = vmatpush.msra.mxu0 0.0
    %507 = vmatpush.msra.mxu0 0.0
    %508 = vmatpush.msra.mxu0 0.0
    %509 = vmatpush.msra.mxu0 0.0
    %510 = vmatpush.msra.mxu0 0.0
    %511 = vmatpush.msra.mxu0 0.0
    %512 = vmatpush.msra.mxu0 0.0
    %513 = vmatpush.msra.mxu0 0.0
    %514 = vmatpush.msra.mxu0 0.0
    %515 = vmatpush.msra.mxu0 0.0
    %v516 = vand.u32 %v495, 4294901760
    %517 = vmatpush.msra.mxu0 %v516
    %v518 = vand.u32 %v494, 4294901760
    %519 = vmatpush.msra.mxu0 %v518
    %v520 = vand.u32 %v493, 4294901760
    %521 = vmatpush.msra.mxu0 %v520
    %v522 = vand.u32 %v492, 4294901760
    %523 = vmatpush.msra.mxu0 %v522
    %v524 = vand.u32 %v502, 4294901760
    %v525 = vsub.f32 %v502, %v524
    %v526 = vand.u32 %v525, 4294901760
    %v527 = vsub.f32 %v525, %v526
    %v528 = vand.u32 %v527, 4294901760
    %529 = vmatmul.f32.gmra.mxu0 %v528
    %v530 = vpop.f32.mrf.mxu0
    %v531 = vadd.f32 %v498, %v530
    %532 = vdwg.mxu0
    %533 = vmatpush.msra.mxu0 0.0
    %534 = vmatpush.msra.mxu0 0.0
    %535 = vmatpush.msra.mxu0 0.0
    %536 = vmatpush.msra.mxu0 0.0
    %537 = vmatpush.msra.mxu0 0.0
    %538 = vmatpush.msra.mxu0 0.0
    %539 = vmatpush.msra.mxu0 0.0
    %540 = vmatpush.msra.mxu0 0.0
    %541 = vmatpush.msra.mxu0 0.0
    %542 = vmatpush.msra.mxu0 0.0
    %543 = vmatpush.msra.mxu0 0.0
    %544 = vmatpush.msra.mxu0 0.0
    %v545 = vand.u32 %v495, 4294901760
    %v546 = vsub.f32 %v495, %v545
    %v547 = vand.u32 %v546, 4294901760
    %v548 = vsub.f32 %v546, %v547
    %v549 = vand.u32 %v548, 4294901760
    %550 = vmatpush.msra.mxu0 %v549
    %v551 = vand.u32 %v494, 4294901760
    %v552 = vsub.f32 %v494, %v551
    %v553 = vand.u32 %v552, 4294901760
    %v554 = vsub.f32 %v552, %v553
    %v555 = vand.u32 %v554, 4294901760
    %556 = vmatpush.msra.mxu0 %v555
    %v557 = vand.u32 %v493, 4294901760
    %v558 = vsub.f32 %v493, %v557
    %v559 = vand.u32 %v558, 4294901760
    %v560 = vsub.f32 %v558, %v559
    %v561 = vand.u32 %v560, 4294901760
    %562 = vmatpush.msra.mxu0 %v561
    %v563 = vand.u32 %v492, 4294901760
    %v564 = vsub.f32 %v492, %v563
    %v565 = vand.u32 %v564, 4294901760
    %v566 = vsub.f32 %v564, %v565
    %v567 = vand.u32 %v566, 4294901760
    %568 = vmatpush.msra.mxu0 %v567
    %v569 = vand.u32 %v502, 4294901760
    %570 = vmatmul.f32.gmra.mxu0 %v569
    %v571 = vpop.f32.mrf.mxu0
    %v572 = vadd.f32 %v531, %v571
    %573 = vdwg.mxu0
    %574 = vmatpush.msra.mxu0 0.0
    %575 = vmatpush.msra.mxu0 0.0
    %576 = vmatpush.msra.mxu0 0.0
    %577 = vmatpush.msra.mxu0 0.0
    %578 = vmatpush.msra.mxu0 0.0
    %579 = vmatpush.msra.mxu0 0.0
    %580 = vmatpush.msra.mxu0 0.0
    %581 = vmatpush.msra.mxu0 0.0
    %582 = vmatpush.msra.mxu0 0.0
    %583 = vmatpush.msra.mxu0 0.0
    %584 = vmatpush.msra.mxu0 0.0
    %585 = vmatpush.msra.mxu0 0.0
    %v586 = vand.u32 %v495, 4294901760
    %v587 = vsub.f32 %v495, %v586
    %588 = vmatpush.msra.mxu0 %v587
    %v589 = vand.u32 %v494, 4294901760
    %v590 = vsub.f32 %v494, %v589
    %591 = vmatpush.msra.mxu0 %v590
    %v592 = vand.u32 %v493, 4294901760
    %v593 = vsub.f32 %v493, %v592
    %594 = vmatpush.msra.mxu0 %v593
    %v595 = vand.u32 %v492, 4294901760
    %v596 = vsub.f32 %v492, %v595
    %597 = vmatpush.msra.mxu0 %v596
    %v598 = vand.u32 %v502, 4294901760
    %v599 = vsub.f32 %v502, %v598
    %600 = vmatmul.f32.gmra.mxu0 %v599
    %v601 = vpop.f32.mrf.mxu0
    %v602 = vadd.f32 %v572, %v601
    %603 = vdwg.mxu0
    %604 = vmatpush.msra.mxu0 0.0
    %605 = vmatpush.msra.mxu0 0.0
    %606 = vmatpush.msra.mxu0 0.0
    %607 = vmatpush.msra.mxu0 0.0
    %608 = vmatpush.msra.mxu0 0.0
    %609 = vmatpush.msra.mxu0 0.0
    %610 = vmatpush.msra.mxu0 0.0
    %611 = vmatpush.msra.mxu0 0.0
    %612 = vmatpush.msra.mxu0 0.0
    %613 = vmatpush.msra.mxu0 0.0
    %614 = vmatpush.msra.mxu0 0.0
    %615 = vmatpush.msra.mxu0 0.0
    %v616 = vand.u32 %v495, 4294901760
    %617 = vmatpush.msra.mxu0 %v616
    %v618 = vand.u32 %v494, 4294901760
    %619 = vmatpush.msra.mxu0 %v618
    %v620 = vand.u32 %v493, 4294901760
    %621 = vmatpush.msra.mxu0 %v620
    %v622 = vand.u32 %v492, 4294901760
    %623 = vmatpush.msra.mxu0 %v622
    %v624 = vand.u32 %v502, 4294901760
    %v625 = vsub.f32 %v502, %v624
    %v626 = vand.u32 %v625, 4294901760
    %627 = vmatmul.f32.gmra.mxu0 %v626
    %v628 = vpop.f32.mrf.mxu0
    %v629 = vadd.f32 %v602, %v628
    %630 = vdwg.mxu0
    %631 = vmatpush.msra.mxu0 0.0
    %632 = vmatpush.msra.mxu0 0.0
    %633 = vmatpush.msra.mxu0 0.0
    %634 = vmatpush.msra.mxu0 0.0
    %635 = vmatpush.msra.mxu0 0.0
    %636 = vmatpush.msra.mxu0 0.0
    %637 = vmatpush.msra.mxu0 0.0
    %638 = vmatpush.msra.mxu0 0.0
    %639 = vmatpush.msra.mxu0 0.0
    %640 = vmatpush.msra.mxu0 0.0
    %641 = vmatpush.msra.mxu0 0.0
    %642 = vmatpush.msra.mxu0 0.0
    %v643 = vand.u32 %v495, 4294901760
    %v644 = vsub.f32 %v495, %v643
    %v645 = vand.u32 %v644, 4294901760
    %646 = vmatpush.msra.mxu0 %v645
    %v647 = vand.u32 %v494, 4294901760
    %v648 = vsub.f32 %v494, %v647
    %v649 = vand.u32 %v648, 4294901760
    %650 = vmatpush.msra.mxu0 %v649
    %v651 = vand.u32 %v493, 4294901760
    %v652 = vsub.f32 %v493, %v651
    %v653 = vand.u32 %v652, 4294901760
    %654 = vmatpush.msra.mxu0 %v653
    %v655 = vand.u32 %v492, 4294901760
    %v656 = vsub.f32 %v492, %v655
    %v657 = vand.u32 %v656, 4294901760
    %658 = vmatpush.msra.mxu0 %v657
    %v659 = vand.u32 %v502, 4294901760
    %660 = vmatmul.f32.gmra.mxu0 %v659
    %v661 = vpop.f32.mrf.mxu0
    %v662 = vadd.f32 %v629, %v661
    %663 = vdwg.mxu0
    %664 = vmatpush.msra.mxu0 0.0
    %665 = vmatpush.msra.mxu0 0.0
    %666 = vmatpush.msra.mxu0 0.0
    %667 = vmatpush.msra.mxu0 0.0
    %668 = vmatpush.msra.mxu0 0.0
    %669 = vmatpush.msra.mxu0 0.0
    %670 = vmatpush.msra.mxu0 0.0
    %671 = vmatpush.msra.mxu0 0.0
    %672 = vmatpush.msra.mxu0 0.0
    %673 = vmatpush.msra.mxu0 0.0
    %674 = vmatpush.msra.mxu0 0.0
    %675 = vmatpush.msra.mxu0 0.0
    %v676 = vand.u32 %v495, 4294901760
    %677 = vmatpush.msra.mxu0 %v676
    %v678 = vand.u32 %v494, 4294901760
    %679 = vmatpush.msra.mxu0 %v678
    %v680 = vand.u32 %v493, 4294901760
    %681 = vmatpush.msra.mxu0 %v680
    %v682 = vand.u32 %v492, 4294901760
    %683 = vmatpush.msra.mxu0 %v682
    %v684 = vand.u32 %v502, 4294901760
    %685 = vmatmul.f32.gmra.mxu0 %v684
    %v686 = vpop.f32.mrf.mxu0
    %v687 = vadd.f32 %v662, %v686
    %688 = vdwg.mxu0
    %689 = vst.msk [vmem:[#allocation2] sm:$0xff] %vm170, %v687
    // Predicated region
    $region26: #{tpu_custom_call.1} parent=1 // pred_check
      _
    $region27: #{tpu_custom_call.1} parent=1 // pred_check_branch
      %691 = sbr.rel (0) target = $region29
    $region28: #{tpu_custom_call.1} parent=1 // pred_region
      %693 = vsyncadd [#allocation3], 96
      %s694 = sshll.u32 [#allocation2], 4
      %s695 = int_to_ptr.vmem [resolvable:$true] %s694
      %s696 = sshll.u32 %s6, 4
      %s697 = int_to_ptr.hbm [resolvable:$true] %s696
      %702 = dma.vmem_to_hbm [thread:$0]  %s695, 32, %s697, [#allocation3], 32, 32, 2
    $region29: #{tpu_custom_call.1} parent=1 // pred_fallthru
      _
    // Predicated region
    $region30: #{tpu_custom_call.1} parent=1 // pred_check
      _
    $region31: #{tpu_custom_call.1} parent=1 // pred_check_branch
      %704 = sbr.rel (0) target = $region33
    $region32: #{tpu_custom_call.1} parent=1 // pred_region
      %706 = dma.done [#allocation3], 128
    $region33: #{tpu_custom_call.1} parent=1 // pred_fallthru
      _
    %707 = vsyncpa [#allocation3], 1

</llo_original>
